<compile_context>
chip_gen: v6e
topology: v6e:2x2x1
jax: 0.10.0
libtpu: 0.0.40
codegen_flags: <defaults>
</compile_context>

<pallas_src>
import functools
import math

import jax
import jax.numpy as jnp
from jax.experimental import pallas as pl
from jax.experimental.pallas import tpu as pltpu


def decoder_kernel(H, z_ref, w_igo_ref, b_igo_ref, w_out_ref, b_out_ref, y_ref):
    z = z_ref[...]                                              # (bt, z_dim)

    # Fused gate pre-activation: lanes [0:H)=i, [H:2H)=g, [2H:3H)=o.  One MXU push + one bias add.
    gates = (jnp.dot(z, w_igo_ref[...], preferred_element_type=jnp.float32)
             + b_igo_ref[...])                                  # (bt, 3H)

    sig = jax.nn.sigmoid(gates)                                 # wide EUP pass (i and o lanes)
    i = sig[:, 0:H]
    o = sig[:, 2 * H:3 * H]
    g = jnp.tanh(gates[:, H:2 * H])                             # EUP pass over g slice

    # LSTM cell, single step with c0 = 0: f * c0 vanishes, so the forget gate is eliminated.
    c = i * g
    h = o * jnp.tanh(c)

    # Final linear layer.
    y_ref[...] = (jnp.dot(h, w_out_ref[...], preferred_element_type=jnp.float32)
                  + b_out_ref[...])


def decoder_forward(z, params, *, batch_tile=256):
    """z: (B, z_dim) float32.  Returns flattened (B * output_dim,) like torch.flatten."""
    B, z_dim = z.shape
    H, out_dim = params["w_out"].shape
    H3 = params["w_igo"].shape[1]

    # Batch tiling: single tile at small B; 256-row tiles (MXU-filling on v6e/v7x,
    # multiple of 8 sublanes) when B is large.
    bt = min(batch_tile, B)
    n_tiles = math.ceil(B / bt)
    Bp = n_tiles * bt
    if Bp != B:
        z = jnp.pad(z, ((0, Bp - B), (0, 0)))

    const = lambda i: (0, 0)    # weights / biases: constant block index -> stay VMEM-resident
    y = pl.pallas_call(
        functools.partial(decoder_kernel, H),
        out_shape=jax.ShapeDtypeStruct((Bp, out_dim), jnp.float32),
        grid=(n_tiles,),
        in_specs=[
            pl.BlockSpec((bt, z_dim), lambda i: (i, 0)),
            pl.BlockSpec((z_dim, H3), const),
            pl.BlockSpec((1, H3), const),
            pl.BlockSpec((H, out_dim), const),
            pl.BlockSpec((1, out_dim), const),
        ],
        out_specs=pl.BlockSpec((bt, out_dim), lambda i: (i, 0)),
        compiler_params=pltpu.CompilerParams(
            dimension_semantics=("parallel",)),
    )(z, params["w_igo"], params["b_igo"], params["w_out"], params["b_out"])
    # TODO(synk): at large B the (bt, output_dim=8) store is lane-sparse (masked vst); a
    # lane-dense repacked output slab would cut store overhead, kept simple to preserve layout.
    return jnp.reshape(y[:B], (-1,))


def init_params(key, z_dim, hidden_dim, output_dim):
    """Deterministic init mirroring nn.LSTM(z_dim, hidden_dim, 1) + nn.Linear shapes."""
    ks = jax.random.split(key, 6)
    bound = 1.0 / jnp.sqrt(hidden_dim)
    H = hidden_dim

    # PyTorch LSTM packs gates as (4H, in) in order [i, f, g, o]; biases are b_ih + b_hh.
    w_ih = jax.random.uniform(ks[0], (4 * H, z_dim), jnp.float32, -bound, bound)
    b_ih = jax.random.uniform(ks[1], (4 * H,), jnp.float32, -bound, bound)
    b_hh = jax.random.uniform(ks[2], (4 * H,), jnp.float32, -bound, bound)
    # W_hh multiplies the zero initial hidden state -> omitted from compute.
    w_out = jax.random.uniform(ks[3], (output_dim, H), jnp.float32, -bound, bound)
    b_out = jax.random.uniform(ks[4], (output_dim,), jnp.float32, -bound, bound)

    b = b_ih + b_hh
    # Drop the dead forget gate; pack [i, g, o] -> (z_dim, 3H) so the kernel does one matmul.
    w_igo = jnp.concatenate(
        [w_ih[0 * H:1 * H], w_ih[2 * H:3 * H], w_ih[3 * H:4 * H]], axis=0).T
    b_igo = jnp.concatenate(
        [b[0 * H:1 * H], b[2 * H:3 * H], b[3 * H:4 * H]]).reshape(1, 3 * H)

    return {
        "w_igo": w_igo,                     # (z_dim, 3H)
        "b_igo": b_igo,                     # (1, 3H)
        "w_out": w_out.T,                   # (H, output_dim)
        "b_out": b_out.reshape(1, output_dim),
    }


def decoder_reference(z, params):
    """Pure-JAX reference of the same forward pass, for a correctness check."""
    H = params["w_out"].shape[0]
    gates = z @ params["w_igo"] + params["b_igo"]
    i = jax.nn.sigmoid(gates[:, 0:H])
    g = jnp.tanh(gates[:, H:2 * H])
    o = jax.nn.sigmoid(gates[:, 2 * H:3 * H])
    c = i * g
    h = o * jnp.tanh(c)
    y = h @ params["w_out"] + params["b_out"]
    return jnp.reshape(y, (-1,))


if __name__ == "__main__":
    z_dim, hidden_dim, output_dim = 16, 32, 8
    batch = 4

    key = jax.random.PRNGKey(0)
    k_z, k_p = jax.random.split(key)
    z = jax.random.normal(k_z, (batch, z_dim), jnp.float32)
    params = init_params(k_p, z_dim, hidden_dim, output_dim)

    out = decoder_forward(z, params)
    out = jax.block_until_ready(out)

    ref = decoder_reference(z, params)
    assert out.shape == (batch * output_dim,)
    assert jnp.allclose(out, ref, atol=1e-5, rtol=1e-5)

    print("KERNEL_OK")
</pallas_src>

<mosaic_0001>
module attributes {stable_mosaic.version = 11 : i64} {
  func.func @decoder_kernel(%arg0: i32, %arg1: memref<4x16xf32, #tpu.memory_space<vmem>>, %arg2: memref<16x96xf32, #tpu.memory_space<vmem>>, %arg3: memref<1x96xf32, #tpu.memory_space<vmem>>, %arg4: memref<32x8xf32, #tpu.memory_space<vmem>>, %arg5: memref<1x8xf32, #tpu.memory_space<vmem>>, %arg6: memref<4x8xf32, #tpu.memory_space<vmem>>) attributes {dimension_semantics = [#tpu.dimension_semantics<parallel>], iteration_bounds = array<i64: 1>, scalar_prefetch = 0 : i64, scratch_operands = 0 : i64, tpu.core_type = #tpu.core_type<tc>, window_params = [{transform_indices = @transform_0, window_bounds = array<i64: 4, 16>}, {pipeline_mode = #tpu.pipeline_mode<synchronous>, transform_indices = @transform_1, window_bounds = array<i64: 16, 96>}, {pipeline_mode = #tpu.pipeline_mode<synchronous>, transform_indices = @transform_2, window_bounds = array<i64: 1, 96>}, {pipeline_mode = #tpu.pipeline_mode<synchronous>, transform_indices = @transform_3, window_bounds = array<i64: 32, 8>}, {pipeline_mode = #tpu.pipeline_mode<synchronous>, transform_indices = @transform_4, window_bounds = array<i64: 1, 8>}, {transform_indices = @transform_5, window_bounds = array<i64: 4, 8>}]} {
    %c0 = arith.constant 0 : index
    %c0_0 = arith.constant 0 : index
    %0 = vector.load %arg1[%c0, %c0_0] : memref<4x16xf32, #tpu.memory_space<vmem>>, vector<4x16xf32>
    %c0_1 = arith.constant 0 : index
    %c0_2 = arith.constant 0 : index
    %1 = vector.load %arg2[%c0_1, %c0_2] : memref<16x96xf32, #tpu.memory_space<vmem>>, vector<16x96xf32>
    %cst = arith.constant dense<0.000000e+00> : vector<4x96xf32>
    %2 = tpu.matmul %0, %1, %cst {dimension_numbers = #tpu.dot_dimension_numbers<[1], [0], [0], [1], [0, 0, 1, 1], [], []>} : vector<4x16xf32>, vector<16x96xf32>, vector<4x96xf32> -> vector<4x96xf32>
    %c0_3 = arith.constant 0 : index
    %c0_4 = arith.constant 0 : index
    %3 = vector.load %arg3[%c0_3, %c0_4] : memref<1x96xf32, #tpu.memory_space<vmem>>, vector<1x96xf32>
    %4 = vector.broadcast %3 : vector<1x96xf32> to vector<4x96xf32>
    %5 = arith.addf %2, %4 : vector<4x96xf32>
    %6 = arith.negf %5 : vector<4x96xf32>
    %7 = math.exp %6 : vector<4x96xf32>
    %cst_5 = arith.constant 1.000000e+00 : f32
    %8 = vector.broadcast %cst_5 : f32 to vector<4x96xf32>
    %9 = arith.addf %8, %7 : vector<4x96xf32>
    %10 = arith.divf %8, %9 : vector<4x96xf32>
    %11 = vector.extract_strided_slice %10 {offsets = [0, 0], sizes = [4, 32], strides = [1, 1]} : vector<4x96xf32> to vector<4x32xf32>
    %12 = vector.extract_strided_slice %10 {offsets = [0, 64], sizes = [4, 32], strides = [1, 1]} : vector<4x96xf32> to vector<4x32xf32>
    %13 = vector.extract_strided_slice %5 {offsets = [0, 32], sizes = [4, 32], strides = [1, 1]} : vector<4x96xf32> to vector<4x32xf32>
    %14 = math.tanh %13 : vector<4x32xf32>
    %15 = arith.mulf %11, %14 : vector<4x32xf32>
    %16 = math.tanh %15 : vector<4x32xf32>
    %17 = arith.mulf %12, %16 : vector<4x32xf32>
    %c0_6 = arith.constant 0 : index
    %c0_7 = arith.constant 0 : index
    %18 = vector.load %arg4[%c0_6, %c0_7] : memref<32x8xf32, #tpu.memory_space<vmem>>, vector<32x8xf32>
    %cst_8 = arith.constant dense<0.000000e+00> : vector<4x8xf32>
    %19 = tpu.matmul %17, %18, %cst_8 {dimension_numbers = #tpu.dot_dimension_numbers<[1], [0], [0], [1], [0, 0, 1, 1], [], []>} : vector<4x32xf32>, vector<32x8xf32>, vector<4x8xf32> -> vector<4x8xf32>
    %c0_9 = arith.constant 0 : index
    %c0_10 = arith.constant 0 : index
    %20 = vector.load %arg5[%c0_9, %c0_10] : memref<1x8xf32, #tpu.memory_space<vmem>>, vector<1x8xf32>
    %21 = vector.broadcast %20 : vector<1x8xf32> to vector<4x8xf32>
    %22 = arith.addf %19, %21 : vector<4x8xf32>
    %c0_11 = arith.constant 0 : index
    %c0_12 = arith.constant 0 : index
    %23 = vector.load %arg6[%c0_11, %c0_12] : memref<4x8xf32, #tpu.memory_space<vmem>>, vector<4x8xf32>
    tpu.vector_store %arg6[%c0_11, %c0_12], %22 {strides = array<i32>} : memref<4x8xf32, #tpu.memory_space<vmem>>, vector<4x8xf32>,
    return
  }
  func.func @transform_0(%arg0: i32) -> (i32, i32) {
    %c0_i32 = arith.constant 0 : i32
    %c0_i32_0 = arith.constant 0 : i32
    return %arg0, %c0_i32 : i32, i32
  }
  func.func @transform_1(%arg0: i32) -> (i32, i32) {
    %c0_i32 = arith.constant 0 : i32
    %c0_i32_0 = arith.constant 0 : i32
    %c0_i32_1 = arith.constant 0 : i32
    return %c0_i32, %c0_i32_0 : i32, i32
  }
  func.func @transform_2(%arg0: i32) -> (i32, i32) {
    %c0_i32 = arith.constant 0 : i32
    %c0_i32_0 = arith.constant 0 : i32
    %c0_i32_1 = arith.constant 0 : i32
    return %c0_i32, %c0_i32_0 : i32, i32
  }
  func.func @transform_3(%arg0: i32) -> (i32, i32) {
    %c0_i32 = arith.constant 0 : i32
    %c0_i32_0 = arith.constant 0 : i32
    %c0_i32_1 = arith.constant 0 : i32
    return %c0_i32, %c0_i32_0 : i32, i32
  }
  func.func @transform_4(%arg0: i32) -> (i32, i32) {
    %c0_i32 = arith.constant 0 : i32
    %c0_i32_0 = arith.constant 0 : i32
    %c0_i32_1 = arith.constant 0 : i32
    return %c0_i32, %c0_i32_0 : i32, i32
  }
  func.func @transform_5(%arg0: i32) -> (i32, i32) {
    %c0_i32 = arith.constant 0 : i32
    %c0_i32_0 = arith.constant 0 : i32
    return %arg0, %c0_i32 : i32, i32
  }
}

</mosaic_0001>

<llo_original>
// kernel: tpu_custom_call.1
$region0: #{tpu_custom_call.1}
  #allocation0 [shape = 'u32[]', space=smem, size = 0x4, offset = 0x4, fixed_abs, tag = 'smem constant byte address 0x4 - core index']
  #allocation1 [shape = 'u32[144,128]{1,0:T(1,128)}', space=vmem, size = 0x12000, scoped, tag = 'internal scratch']
  %s0 = inlined_call_operand.vmem [shape: f32[4,16], index: 0, kind: input, shape index: {}]
  %s1 = inlined_call_operand.vmem [shape: f32[16,96], index: 1, kind: input, shape index: {}]
  %s2 = inlined_call_operand.vmem [shape: f32[1,96], index: 2, kind: input, shape index: {}]
  %s3 = inlined_call_operand.vmem [shape: f32[32,8], index: 3, kind: input, shape index: {}]
  %s4 = inlined_call_operand.vmem [shape: f32[1,8], index: 4, kind: input, shape index: {}]
  %s5 = inlined_call_operand.hbm [shape: f32[4,8], index: 5, kind: output, shape index: {}]
  %s6 = sld [smem:[#allocation0]]
  $region30: #{tpu_custom_call.1} parent=0
    _
  %s8 = ssub.s32 1, %s6
  %s9 = scalar_select 0, %s8, %s6
  $region1: #{tpu_custom_call.1} parent=0
    #allocation2 [shape = 'u8[2048]{0}', space=vmem, size = 0x800, scoped, tag = 'output window, operand 0, single buffered']
    #allocation3 [shape = 's32[1]{0}', space=sflag, size = 0x4, scoped, tag = 'scoped memory for tpu_custom_call.1']
    %10 = vsyncpa [#allocation3], 0
    // Predicated region
    $region2: #{tpu_custom_call.1} parent=1 // pred_check
      _
    $region3: #{tpu_custom_call.1} parent=1 // pred_check_branch
      %12 = sbr.rel (0) target = $region5
    $region4: #{tpu_custom_call.1} parent=1 // pred_region
      _
    $region5: #{tpu_custom_call.1} parent=1 // pred_fallthru
      _
    // Predicated region
    $region6: #{tpu_custom_call.1} parent=1 // pred_check
      _
    $region7: #{tpu_custom_call.1} parent=1 // pred_check_branch
      %14 = sbr.rel (0) target = $region9
    $region8: #{tpu_custom_call.1} parent=1 // pred_region
      _
    $region9: #{tpu_custom_call.1} parent=1 // pred_fallthru
      _
    // Predicated region
    $region10: #{tpu_custom_call.1} parent=1 // pred_check
      _
    $region11: #{tpu_custom_call.1} parent=1 // pred_check_branch
      %16 = sbr.rel (0) target = $region13
    $region12: #{tpu_custom_call.1} parent=1 // pred_region
      _
    $region13: #{tpu_custom_call.1} parent=1 // pred_fallthru
      _
    // Predicated region
    $region14: #{tpu_custom_call.1} parent=1 // pred_check
      _
    $region15: #{tpu_custom_call.1} parent=1 // pred_check_branch
      %18 = sbr.rel (0) target = $region17
    $region16: #{tpu_custom_call.1} parent=1 // pred_region
      _
    $region17: #{tpu_custom_call.1} parent=1 // pred_fallthru
      _
    // Predicated region
    $region18: #{tpu_custom_call.1} parent=1 // pred_check
      _
    $region19: #{tpu_custom_call.1} parent=1 // pred_check_branch
      %20 = sbr.rel (0) target = $region21
    $region20: #{tpu_custom_call.1} parent=1 // pred_region
      _
    $region21: #{tpu_custom_call.1} parent=1 // pred_fallthru
      _
    %v21 = vld [vmem:[%s0] sm:$0xf]
    %v22 = vld [vmem:[%s1] sm:$0xff]
    %v23 = vld [vmem:[%s1 + $0x8] sm:$0xff]
    %v24 = vld [vmem:[%s2] sm:$0x1]
    %v26 = vlaneseq
    %v27 = vshrl.u32 %v26, 7
    %v28 = vsub.s32 0, %v27
    %v29 = vrot.slane %v24, %v28
    %vm31 = vcmask 130048
    %v33 = vsel %vm31, %v21, 0
    %35 = vmatprep.subr.mxu0 0.0
    %36 = vmatpush1.msra.mxu0 0.0
    %37 = vmatprep.subr.mxu0 0.0
    %38 = vmatpush1.msra.mxu0 0.0
    %39 = vmatprep.subr.mxu0 0.0
    %40 = vmatpush1.msra.mxu0 0.0
    %41 = vmatprep.subr.mxu0 0.0
    %42 = vmatpush1.msra.mxu0 0.0
    %43 = vmatprep.subr.mxu0 0.0
    %44 = vmatpush1.msra.mxu0 0.0
    %45 = vmatprep.subr.mxu0 0.0
    %46 = vmatpush1.msra.mxu0 0.0
    %47 = vmatprep.subr.mxu0 0.0
    %48 = vmatpush1.msra.mxu0 0.0
    %49 = vmatprep.subr.mxu0 0.0
    %50 = vmatpush1.msra.mxu0 0.0
    %51 = vmatprep.subr.mxu0 0.0
    %52 = vmatpush1.msra.mxu0 0.0
    %53 = vmatprep.subr.mxu0 0.0
    %54 = vmatpush1.msra.mxu0 0.0
    %55 = vmatprep.subr.mxu0 0.0
    %56 = vmatpush1.msra.mxu0 0.0
    %57 = vmatprep.subr.mxu0 0.0
    %58 = vmatpush1.msra.mxu0 0.0
    %59 = vmatprep.subr.mxu0 0.0
    %60 = vmatpush1.msra.mxu0 0.0
    %61 = vmatprep.subr.mxu0 0.0
    %62 = vmatpush1.msra.mxu0 0.0
    %63 = vmatprep.subr.mxu0 0.0
    %64 = vmatpush1.msra.mxu0 %v23
    %65 = vmatprep.subr.mxu0 0.0
    %66 = vmatpush1.msra.mxu0 %v22
    %67 = vmatprep.subr.mxu0 0.0
    %68 = vmatpush2.msra.mxu0 0.0
    %69 = vmatprep.subr.mxu0 0.0
    %70 = vmatpush2.msra.mxu0 0.0
    %71 = vmatprep.subr.mxu0 0.0
    %72 = vmatpush2.msra.mxu0 0.0
    %73 = vmatprep.subr.mxu0 0.0
    %74 = vmatpush2.msra.mxu0 0.0
    %75 = vmatprep.subr.mxu0 0.0
    %76 = vmatpush2.msra.mxu0 0.0
    %77 = vmatprep.subr.mxu0 0.0
    %78 = vmatpush2.msra.mxu0 0.0
    %79 = vmatprep.subr.mxu0 0.0
    %80 = vmatpush2.msra.mxu0 0.0
    %81 = vmatprep.subr.mxu0 0.0
    %82 = vmatpush2.msra.mxu0 0.0
    %83 = vmatprep.subr.mxu0 0.0
    %84 = vmatpush2.msra.mxu0 0.0
    %85 = vmatprep.subr.mxu0 0.0
    %86 = vmatpush2.msra.mxu0 0.0
    %87 = vmatprep.subr.mxu0 0.0
    %88 = vmatpush2.msra.mxu0 0.0
    %89 = vmatprep.subr.mxu0 0.0
    %90 = vmatpush2.msra.mxu0 0.0
    %91 = vmatprep.subr.mxu0 0.0
    %92 = vmatpush2.msra.mxu0 0.0
    %93 = vmatprep.subr.mxu0 0.0
    %94 = vmatpush2.msra.mxu0 0.0
    %95 = vmatprep.subr.mxu0 0.0
    %96 = vmatpush2.msra.mxu0 0.0
    %97 = vmatprep.subr.mxu0 0.0
    %98 = vmatpush2.msra.mxu0 0.0
    %99 = vmatprep.mubr.f32.mxu0 0.0
    %100 = vmatmul.mubr.f32.gmra.mxu0 %v33
    %v101 = vpop.f32.mrf.mxu0
    %v102 = vadd.f32 %v29, %v101
    %v103 = vpop.f32.mrf.mxu0
    %104 = vdwg.mxu0
    %v105 = vxor.u32 %v102, 2147483648
    %v106 = vmul.f32 %v105, 1.442695
    %v107 = vpow.pop %v106
    %v108 = vadd.f32 %v107, 1.0
    %v109 = vrcp.pop %v108
    %v110 = vmul.f32 1.0, %v109
    %v111 = vtanh.pop %v102
    %113 = vrot.lane.b32.xlu0 %v111, 96
    %v114 = vpop.permute.xlu0 %113
    %v116 = vmul.f32 %v110, %v114
    %v117 = vtanh.pop %v116
    %119 = vrot.lane.b32.xlu0 %v117, 64
    %v120 = vpop.permute.xlu0 %119
    %v122 = vmul.f32 %v110, %v120
    %v123 = vld [vmem:[%s3] sm:$0xff]
    %v124 = vld [vmem:[%s3 + $0x8] sm:$0xff]
    %v125 = vld [vmem:[%s3 + $0x10] sm:$0xff]
    %v126 = vld [vmem:[%s3 + $0x18] sm:$0xff]
    %v127 = vld [vmem:[%s4] sm:$0x1]
    %v129 = vlaneseq
    %v130 = vshrl.u32 %v129, 7
    %v131 = vsub.s32 0, %v130
    %v132 = vrot.slane %v127, %v131
    %135 = vrot.lane.b32.xlu0 %v122, 64
    %v136 = vpop.permute.xlu0 %135
    %vm137 = vcmask 261120
    %v138 = vsel %vm137, %v136, 0
    %140 = vmatprep.subr.mxu0 0.0
    %141 = vmatpush1.msra.mxu0 0.0
    %142 = vmatprep.subr.mxu0 0.0
    %143 = vmatpush1.msra.mxu0 0.0
    %144 = vmatprep.subr.mxu0 0.0
    %145 = vmatpush1.msra.mxu0 0.0
    %146 = vmatprep.subr.mxu0 0.0
    %147 = vmatpush1.msra.mxu0 0.0
    %148 = vmatprep.subr.mxu0 0.0
    %149 = vmatpush1.msra.mxu0 0.0
    %150 = vmatprep.subr.mxu0 0.0
    %151 = vmatpush1.msra.mxu0 0.0
    %152 = vmatprep.subr.mxu0 0.0
    %153 = vmatpush1.msra.mxu0 0.0
    %154 = vmatprep.subr.mxu0 0.0
    %155 = vmatpush1.msra.mxu0 0.0
    %156 = vmatprep.subr.mxu0 0.0
    %157 = vmatpush1.msra.mxu0 0.0
    %158 = vmatprep.subr.mxu0 0.0
    %159 = vmatpush1.msra.mxu0 0.0
    %160 = vmatprep.subr.mxu0 0.0
    %161 = vmatpush1.msra.mxu0 0.0
    %162 = vmatprep.subr.mxu0 0.0
    %163 = vmatpush1.msra.mxu0 0.0
    %164 = vmatprep.subr.mxu0 0.0
    %165 = vmatpush1.msra.mxu0 %v126
    %166 = vmatprep.subr.mxu0 0.0
    %167 = vmatpush1.msra.mxu0 %v125
    %168 = vmatprep.subr.mxu0 0.0
    %169 = vmatpush1.msra.mxu0 %v124
    %170 = vmatprep.subr.mxu0 0.0
    %171 = vmatpush1.msra.mxu0 %v123
    %172 = vmatprep.subr.mxu0 0.0
    %173 = vmatpush2.msra.mxu0 0.0
    %174 = vmatprep.subr.mxu0 0.0
    %175 = vmatpush2.msra.mxu0 0.0
    %176 = vmatprep.subr.mxu0 0.0
    %177 = vmatpush2.msra.mxu0 0.0
    %178 = vmatprep.subr.mxu0 0.0
    %179 = vmatpush2.msra.mxu0 0.0
    %180 = vmatprep.subr.mxu0 0.0
    %181 = vmatpush2.msra.mxu0 0.0
    %182 = vmatprep.subr.mxu0 0.0
    %183 = vmatpush2.msra.mxu0 0.0
    %184 = vmatprep.subr.mxu0 0.0
    %185 = vmatpush2.msra.mxu0 0.0
    %186 = vmatprep.subr.mxu0 0.0
    %187 = vmatpush2.msra.mxu0 0.0
    %188 = vmatprep.subr.mxu0 0.0
    %189 = vmatpush2.msra.mxu0 0.0
    %190 = vmatprep.subr.mxu0 0.0
    %191 = vmatpush2.msra.mxu0 0.0
    %192 = vmatprep.subr.mxu0 0.0
    %193 = vmatpush2.msra.mxu0 0.0
    %194 = vmatprep.subr.mxu0 0.0
    %195 = vmatpush2.msra.mxu0 0.0
    %196 = vmatprep.subr.mxu0 0.0
    %197 = vmatpush2.msra.mxu0 0.0
    %198 = vmatprep.subr.mxu0 0.0
    %199 = vmatpush2.msra.mxu0 0.0
    %200 = vmatprep.subr.mxu0 0.0
    %201 = vmatpush2.msra.mxu0 0.0
    %202 = vmatprep.subr.mxu0 0.0
    %203 = vmatpush2.msra.mxu0 0.0
    %204 = vmatprep.mubr.f32.mxu0 0.0
    %205 = vmatmul.mubr.f32.gmra.mxu0 %v138
    %v206 = vpop.f32.mrf.mxu0
    %v207 = vadd.f32 %v132, %v206
    %v208 = vpop.f32.mrf.mxu0
    %209 = vdwg.mxu0
    %vm210 = vcmask 60416
    %211 = vst.msk [vmem:[#allocation2] sm:$0xf] %vm210, %v207
    // Predicated region
    $region22: #{tpu_custom_call.1} parent=1 // pred_check
      _
    $region23: #{tpu_custom_call.1} parent=1 // pred_check_branch
      %213 = sbr.rel (0) target = $region25
    $region24: #{tpu_custom_call.1} parent=1 // pred_region
      %s215 = ssub.s32 64, 64
      %216 = vsyncadd [#allocation3], %s215
      %s218 = sshll.u32 [#allocation2], 4
      %s219 = int_to_ptr.vmem [resolvable:$true] %s218
      %221 = dma.vmem_to_hbm [thread:$0]  %s219, 64, %s5, [#allocation3]
    $region25: #{tpu_custom_call.1} parent=1 // pred_fallthru
      _
    // Predicated region
    $region26: #{tpu_custom_call.1} parent=1 // pred_check
      _
    $region27: #{tpu_custom_call.1} parent=1 // pred_check_branch
      %223 = sbr.rel (0) target = $region29
    $region28: #{tpu_custom_call.1} parent=1 // pred_region
      %224 = dma.done [#allocation3], 64
    $region29: #{tpu_custom_call.1} parent=1 // pred_fallthru
      _
    %225 = vsyncpa [#allocation3], 1

</llo_original>
